<compile_context>
chip_gen: v6e
topology: v6e:2x2x1
jax: 0.10.0
libtpu: 0.0.40
codegen_flags: <defaults>
</compile_context>

<pallas_src>
import functools

import jax
import jax.numpy as jnp
from jax.experimental import pallas as pl
from jax.experimental.pallas import tpu as pltpu


def policy_net_kernel(state_ref, w1_ref, b1_ref, w2_ref, b2_ref, out_ref, *, out_valid):
    # ---- fc1 + ReLU (bf16 operands, f32 MXU accumulate) ----
    x = state_ref[...].astype(jnp.bfloat16)                      # (TB, In_p)
    h = jnp.dot(x, w1_ref[...], preferred_element_type=jnp.float32)
    h = jnp.maximum(h + b1_ref[...], 0.0)                        # f32 bias + ReLU

    # ---- fc2 ----
    logits = jnp.dot(h.astype(jnp.bfloat16), w2_ref[...],
                     preferred_element_type=jnp.float32)
    logits = logits + b2_ref[...]                                # (TB, Out_p), f32

    # ---- mask padded output lanes so softmax only sees the real Out logits ----
    lane = jax.lax.broadcasted_iota(jnp.int32, logits.shape, dimension=1)
    logits = jnp.where(lane < out_valid, logits, -1e30)

    # ---- numerically stable softmax over the last axis ----
    m = jnp.max(logits, axis=-1, keepdims=True)
    e = jnp.exp(logits - m)                                      # padded lanes -> 0
    denom = jnp.sum(e, axis=-1, keepdims=True)
    out_ref[...] = e * pl.reciprocal(denom, approx=True)


def _round_up(x, m):
    return ((x + m - 1) // m) * m


def _pad2d(a, rows, cols):
    r, c = a.shape
    return jnp.pad(a, ((0, rows - r), (0, cols - c)))


def policy_network_forward(state, w1, b1, w2, b2):
    """state: (B, In) f32; w1: (In, H); b1: (1, H); w2: (H, Out); b2: (1, Out)."""
    B, In = state.shape
    H = w1.shape[1]
    Out = w2.shape[1]

    LANE = 128
    In_p = _round_up(In, LANE)     # contraction dim, 128-multiple for clean MXU passes
    H_p = _round_up(H, LANE)
    Out_p = _round_up(Out, LANE)   # lane-dense output -> full-width vst

    # Batch tile: 128-row blocks for large batches; small batches round up to
    # the f32 sublane count (8) so we still feed the MXU whole sublane tiles.
    TB = 128 if B >= 128 else _round_up(B, 8)
    B_p = _round_up(B, TB)

    state_p = _pad2d(state.astype(jnp.float32), B_p, In_p)
    w1_p = _pad2d(w1, In_p, H_p).astype(jnp.bfloat16)            # bf16 weights: half DMA
    b1_p = _pad2d(b1, 1, H_p).astype(jnp.float32)
    w2_p = _pad2d(w2, H_p, Out_p).astype(jnp.bfloat16)
    b2_p = _pad2d(b2, 1, Out_p).astype(jnp.float32)

    kernel = functools.partial(policy_net_kernel, out_valid=Out)

    out_p = pl.pallas_call(
        kernel,
        out_shape=jax.ShapeDtypeStruct((B_p, Out_p), jnp.float32),
        grid=(B_p // TB,),
        in_specs=[
            pl.BlockSpec((TB, In_p), lambda i: (i, 0)),          # batch-tiled state
            pl.BlockSpec((In_p, H_p), lambda i: (0, 0)),         # weights resident
            pl.BlockSpec((1, H_p), lambda i: (0, 0)),            # across batch blocks
            pl.BlockSpec((H_p, Out_p), lambda i: (0, 0)),
            pl.BlockSpec((1, Out_p), lambda i: (0, 0)),
        ],
        out_specs=pl.BlockSpec((TB, Out_p), lambda i: (i, 0)),
        compiler_params=pltpu.CompilerParams(
            dimension_semantics=("parallel",),                   # megacore-split batch
        ),
    )(state_p, w1_p, b1_p, w2_p, b2_p)

    return out_p[:B, :Out]


def reference_forward_bf16(state, w1, b1, w2, b2):
    # Matches the kernel's math (bf16 matmul operands, f32 accumulate / elementwise).
    h = jnp.dot(state.astype(jnp.bfloat16), w1.astype(jnp.bfloat16),
                preferred_element_type=jnp.float32) + b1
    h = jnp.maximum(h, 0.0)
    logits = jnp.dot(h.astype(jnp.bfloat16), w2.astype(jnp.bfloat16),
                     preferred_element_type=jnp.float32) + b2
    return jax.nn.softmax(logits, axis=-1)


def reference_forward_f32(state, w1, b1, w2, b2):
    h = jnp.maximum(state @ w1 + b1, 0.0)
    logits = h @ w2 + b2
    return jax.nn.softmax(logits, axis=-1)


if __name__ == "__main__":
    # Small shapes consistent with the module: a REINFORCE policy net.
    batch = 2
    input_size = 4
    hidden_size = 32
    output_size = 4

    key = jax.random.PRNGKey(0)
    k_s, k_w1, k_b1, k_w2, k_b2 = jax.random.split(key, 5)

    state = jax.random.normal(k_s, (batch, input_size), dtype=jnp.float32)

    # Deterministic synthetic parameters (nn.Linear shapes, stored transposed).
    w1 = jax.random.normal(k_w1, (input_size, hidden_size), dtype=jnp.float32) * 0.1
    b1 = jax.random.normal(k_b1, (1, hidden_size), dtype=jnp.float32) * 0.1
    w2 = jax.random.normal(k_w2, (hidden_size, output_size), dtype=jnp.float32) * 0.1
    b2 = jax.random.normal(k_b2, (1, output_size), dtype=jnp.float32) * 0.1

    out = policy_network_forward(state, w1, b1, w2, b2)
    out = jax.block_until_ready(out)

    ref_bf16 = reference_forward_bf16(state, w1, b1, w2, b2)
    ref_f32 = reference_forward_f32(state, w1, b1, w2, b2)

    assert out.shape == (batch, output_size)
    # Tight check vs. a reference using the same bf16-operand / f32-accum math
    # (tolerance also covers the EUP approx reciprocal).
    assert jnp.allclose(out, ref_bf16, atol=2e-3, rtol=2e-3), "mismatch vs bf16 reference"
    # Loose sanity check vs. the pure-f32 reference (bf16 operand rounding).
    assert jnp.allclose(out, ref_f32, atol=2e-2, rtol=2e-2), "mismatch vs f32 reference"
    assert jnp.allclose(jnp.sum(out, axis=-1), 1.0, atol=2e-3), "softmax rows must sum to 1"

    print("KERNEL_OK")
</pallas_src>

<mosaic_0001>
module attributes {stable_mosaic.version = 11 : i64} {
  func.func @policy_net_kernel(%arg0: i32, %arg1: memref<8x128xf32, #tpu.memory_space<vmem>>, %arg2: memref<128x128xbf16, #tpu.memory_space<vmem>>, %arg3: memref<1x128xf32, #tpu.memory_space<vmem>>, %arg4: memref<128x128xbf16, #tpu.memory_space<vmem>>, %arg5: memref<1x128xf32, #tpu.memory_space<vmem>>, %arg6: memref<8x128xf32, #tpu.memory_space<vmem>>) attributes {dimension_semantics = [#tpu.dimension_semantics<parallel>], iteration_bounds = array<i64: 1>, scalar_prefetch = 0 : i64, scratch_operands = 0 : i64, tpu.core_type = #tpu.core_type<tc>, window_params = [{transform_indices = @transform_0, window_bounds = array<i64: 8, 128>}, {pipeline_mode = #tpu.pipeline_mode<synchronous>, transform_indices = @transform_1, window_bounds = array<i64: 128, 128>}, {pipeline_mode = #tpu.pipeline_mode<synchronous>, transform_indices = @transform_2, window_bounds = array<i64: 1, 128>}, {pipeline_mode = #tpu.pipeline_mode<synchronous>, transform_indices = @transform_3, window_bounds = array<i64: 128, 128>}, {pipeline_mode = #tpu.pipeline_mode<synchronous>, transform_indices = @transform_4, window_bounds = array<i64: 1, 128>}, {transform_indices = @transform_5, window_bounds = array<i64: 8, 128>}]} {
    %c0 = arith.constant 0 : index
    %c0_0 = arith.constant 0 : index
    %0 = vector.load %arg1[%c0, %c0_0] : memref<8x128xf32, #tpu.memory_space<vmem>>, vector<8x128xf32>
    %1 = arith.truncf %0 : vector<8x128xf32> to vector<8x128xbf16>
    %c0_1 = arith.constant 0 : index
    %c0_2 = arith.constant 0 : index
    %2 = vector.load %arg2[%c0_1, %c0_2] : memref<128x128xbf16, #tpu.memory_space<vmem>>, vector<128x128xbf16>
    %cst = arith.constant dense<0.000000e+00> : vector<8x128xf32>
    %3 = tpu.matmul %1, %2, %cst {dimension_numbers = #tpu.dot_dimension_numbers<[1], [0], [0], [1], [0, 0, 1, 1], [], []>} : vector<8x128xbf16>, vector<128x128xbf16>, vector<8x128xf32> -> vector<8x128xf32>
    %c0_3 = arith.constant 0 : index
    %c0_4 = arith.constant 0 : index
    %4 = vector.load %arg3[%c0_3, %c0_4] : memref<1x128xf32, #tpu.memory_space<vmem>>, vector<1x128xf32>
    %5 = vector.broadcast %4 : vector<1x128xf32> to vector<8x128xf32>
    %6 = arith.addf %3, %5 : vector<8x128xf32>
    %cst_5 = arith.constant 0.000000e+00 : f32
    %7 = vector.broadcast %cst_5 : f32 to vector<8x128xf32>
    %8 = arith.maximumf %6, %7 : vector<8x128xf32>
    %9 = arith.truncf %8 : vector<8x128xf32> to vector<8x128xbf16>
    %c0_6 = arith.constant 0 : index
    %c0_7 = arith.constant 0 : index
    %10 = vector.load %arg4[%c0_6, %c0_7] : memref<128x128xbf16, #tpu.memory_space<vmem>>, vector<128x128xbf16>
    %cst_8 = arith.constant dense<0.000000e+00> : vector<8x128xf32>
    %11 = tpu.matmul %9, %10, %cst_8 {dimension_numbers = #tpu.dot_dimension_numbers<[1], [0], [0], [1], [0, 0, 1, 1], [], []>} : vector<8x128xbf16>, vector<128x128xbf16>, vector<8x128xf32> -> vector<8x128xf32>
    %c0_9 = arith.constant 0 : index
    %c0_10 = arith.constant 0 : index
    %12 = vector.load %arg5[%c0_9, %c0_10] : memref<1x128xf32, #tpu.memory_space<vmem>>, vector<1x128xf32>
    %13 = vector.broadcast %12 : vector<1x128xf32> to vector<8x128xf32>
    %14 = arith.addf %11, %13 : vector<8x128xf32>
    %15 = tpu.iota {dimensions = array<i32: 1>} : vector<8x128xi32>
    %c4_i32 = arith.constant 4 : i32
    %16 = vector.broadcast %c4_i32 : i32 to vector<8x128xi32>
    %17 = arith.cmpi slt, %15, %16 : vector<8x128xi32>
    %cst_11 = arith.constant -1.000000e+30 : f32
    %18 = vector.broadcast %cst_11 : f32 to vector<8x128xf32>
    %19 = arith.select %17, %14, %18 : vector<8x128xi1>, vector<8x128xf32>
    %cst_12 = arith.constant dense<0xFF800000> : vector<8xf32>
    %20 = vector.multi_reduction <maximumf>, %19, %cst_12 [1] : vector<8x128xf32> to vector<8xf32>
    %21 = vector.shape_cast %20 : vector<8xf32> to vector<8x1xf32>
    %22 = vector.broadcast %21 : vector<8x1xf32> to vector<8x128xf32>
    %23 = arith.subf %19, %22 : vector<8x128xf32>
    %24 = math.exp %23 : vector<8x128xf32>
    %cst_13 = arith.constant dense<0.000000e+00> : vector<8xf32>
    %25 = vector.multi_reduction <add>, %24, %cst_13 [1] : vector<8x128xf32> to vector<8xf32>
    %26 = vector.shape_cast %25 : vector<8xf32> to vector<8x1xf32>
    %27 = tpu.reciprocal %26 {approx = true} : vector<8x1xf32> -> vector<8x1xf32>
    %28 = vector.broadcast %27 : vector<8x1xf32> to vector<8x128xf32>
    %29 = arith.mulf %24, %28 : vector<8x128xf32>
    %c0_14 = arith.constant 0 : index
    %c0_15 = arith.constant 0 : index
    %30 = vector.load %arg6[%c0_14, %c0_15] : memref<8x128xf32, #tpu.memory_space<vmem>>, vector<8x128xf32>
    tpu.vector_store %arg6[%c0_14, %c0_15], %29 {strides = array<i32>} : memref<8x128xf32, #tpu.memory_space<vmem>>, vector<8x128xf32>,
    return
  }
  func.func @transform_0(%arg0: i32) -> (i32, i32) {
    %c0_i32 = arith.constant 0 : i32
    %c0_i32_0 = arith.constant 0 : i32
    return %arg0, %c0_i32 : i32, i32
  }
  func.func @transform_1(%arg0: i32) -> (i32, i32) {
    %c0_i32 = arith.constant 0 : i32
    %c0_i32_0 = arith.constant 0 : i32
    %c0_i32_1 = arith.constant 0 : i32
    return %c0_i32, %c0_i32_0 : i32, i32
  }
  func.func @transform_2(%arg0: i32) -> (i32, i32) {
    %c0_i32 = arith.constant 0 : i32
    %c0_i32_0 = arith.constant 0 : i32
    %c0_i32_1 = arith.constant 0 : i32
    return %c0_i32, %c0_i32_0 : i32, i32
  }
  func.func @transform_3(%arg0: i32) -> (i32, i32) {
    %c0_i32 = arith.constant 0 : i32
    %c0_i32_0 = arith.constant 0 : i32
    %c0_i32_1 = arith.constant 0 : i32
    return %c0_i32, %c0_i32_0 : i32, i32
  }
  func.func @transform_4(%arg0: i32) -> (i32, i32) {
    %c0_i32 = arith.constant 0 : i32
    %c0_i32_0 = arith.constant 0 : i32
    %c0_i32_1 = arith.constant 0 : i32
    return %c0_i32, %c0_i32_0 : i32, i32
  }
  func.func @transform_5(%arg0: i32) -> (i32, i32) {
    %c0_i32 = arith.constant 0 : i32
    %c0_i32_0 = arith.constant 0 : i32
    return %arg0, %c0_i32 : i32, i32
  }
}

</mosaic_0001>

<llo_original>
// kernel: tpu_custom_call.1
$region0: #{tpu_custom_call.1}
  #allocation0 [shape = 'u32[]', space=smem, size = 0x4, offset = 0x4, fixed_abs, tag = 'smem constant byte address 0x4 - core index']
  #allocation1 [shape = 'u32[144,128]{1,0:T(1,128)}', space=vmem, size = 0x12000, scoped, tag = 'internal scratch']
  %s0 = inlined_call_operand.hbm [shape: f32[8,128], index: 0, kind: input, shape index: {}]
  %s1 = inlined_call_operand.hbm [shape: bf16[128,128], index: 1, kind: input, shape index: {}]
  %s2 = inlined_call_operand.vmem [shape: f32[1,128], index: 2, kind: input, shape index: {}]
  %s3 = inlined_call_operand.hbm [shape: bf16[128,128], index: 3, kind: input, shape index: {}]
  %s4 = inlined_call_operand.vmem [shape: f32[1,128], index: 4, kind: input, shape index: {}]
  %s5 = inlined_call_operand.hbm [shape: f32[8,128], index: 5, kind: output, shape index: {}]
  %s6 = sld [smem:[#allocation0]]
  $region42: #{tpu_custom_call.1} parent=0
    _
  %s8 = ssub.s32 1, %s6
  %s9 = scalar_select 0, %s8, %s6
  $region1: #{tpu_custom_call.1} parent=0
    #allocation2 [shape = 'u8[4096]{0}', space=vmem, size = 0x1000, scoped, tag = 'input window, operand 0, single buffered']
    #allocation3 [shape = 's32[1]{0}', space=sflag, size = 0x4, scoped, tag = 'scoped memory for tpu_custom_call.1']
    #allocation4 [shape = 's32[1]{0}', space=sflag, size = 0x4, scoped, tag = 'scoped memory for tpu_custom_call.1']
    #allocation5 [shape = 'u8[32768]{0}', space=vmem, size = 0x8000, scoped, tag = 'input window, operand 1, single buffered']
    #allocation6 [shape = 's32[1]{0}', space=sflag, size = 0x4, scoped, tag = 'scoped memory for tpu_custom_call.1']
    #allocation7 [shape = 'u8[32768]{0}', space=vmem, size = 0x8000, scoped, tag = 'input window, operand 3, single buffered']
    #allocation8 [shape = 'u8[4096]{0}', space=vmem, size = 0x1000, scoped, tag = 'output window, operand 0, single buffered']
    %10 = vsyncpa [#allocation3], 0
    %11 = vsyncpa [#allocation6], 0
    %12 = vsyncpa [#allocation4], 0
    // Predicated region
    $region2: #{tpu_custom_call.1} parent=1 // pred_check
      _
    $region3: #{tpu_custom_call.1} parent=1 // pred_check_branch
      %14 = sbr.rel (0) target = $region5
    $region4: #{tpu_custom_call.1} parent=1 // pred_region
      %s16 = ssub.s32 128, 128
      %17 = vsyncadd [#allocation3], %s16
      %s19 = sshll.u32 [#allocation2], 4
      %s20 = int_to_ptr.vmem [resolvable:$true] %s19
      %22 = dma.hbm_to_vmem [thread:$0]  %s0, 128, %s20, [#allocation3]
    $region5: #{tpu_custom_call.1} parent=1 // pred_fallthru
      _
    // Predicated region
    $region6: #{tpu_custom_call.1} parent=1 // pred_check
      _
    $region7: #{tpu_custom_call.1} parent=1 // pred_check_branch
      %24 = sbr.rel (0) target = $region9
    $region8: #{tpu_custom_call.1} parent=1 // pred_region
      %s26 = ssub.s32 1024, 1024
      %27 = vsyncadd [#allocation6], %s26
      %s28 = sshll.u32 [#allocation5], 4
      %s29 = int_to_ptr.vmem [resolvable:$true] %s28
      %34 = dma.hbm_to_vmem [thread:$0]  %s1, 1024, %s29, [#allocation6], 64, 64, 4
    $region9: #{tpu_custom_call.1} parent=1 // pred_fallthru
      _
    // Predicated region
    $region10: #{tpu_custom_call.1} parent=1 // pred_check
      _
    $region11: #{tpu_custom_call.1} parent=1 // pred_check_branch
      %36 = sbr.rel (0) target = $region13
    $region12: #{tpu_custom_call.1} parent=1 // pred_region
      _
    $region13: #{tpu_custom_call.1} parent=1 // pred_fallthru
      _
    // Predicated region
    $region14: #{tpu_custom_call.1} parent=1 // pred_check
      _
    $region15: #{tpu_custom_call.1} parent=1 // pred_check_branch
      %38 = sbr.rel (0) target = $region17
    $region16: #{tpu_custom_call.1} parent=1 // pred_region
      %s40 = ssub.s32 1024, 1024
      %41 = vsyncadd [#allocation6], %s40
      %s42 = sshll.u32 [#allocation7], 4
      %s43 = int_to_ptr.vmem [resolvable:$true] %s42
      %48 = dma.hbm_to_vmem [thread:$0]  %s3, 1024, %s43, [#allocation6], 64, 64, 4
    $region17: #{tpu_custom_call.1} parent=1 // pred_fallthru
      _
    // Predicated region
    $region18: #{tpu_custom_call.1} parent=1 // pred_check
      _
    $region19: #{tpu_custom_call.1} parent=1 // pred_check_branch
      %50 = sbr.rel (0) target = $region21
    $region20: #{tpu_custom_call.1} parent=1 // pred_region
      _
    $region21: #{tpu_custom_call.1} parent=1 // pred_fallthru
      _
    // Predicated region
    $region22: #{tpu_custom_call.1} parent=1 // pred_check
      _
    $region23: #{tpu_custom_call.1} parent=1 // pred_check_branch
      %52 = sbr.rel (0) target = $region25
    $region24: #{tpu_custom_call.1} parent=1 // pred_region
      %53 = dma.done [#allocation3], 128
    $region25: #{tpu_custom_call.1} parent=1 // pred_fallthru
      _
    // Predicated region
    $region26: #{tpu_custom_call.1} parent=1 // pred_check
      _
    $region27: #{tpu_custom_call.1} parent=1 // pred_check_branch
      %55 = sbr.rel (0) target = $region29
    $region28: #{tpu_custom_call.1} parent=1 // pred_region
      %56 = dma.done [#allocation6], 1024
    $region29: #{tpu_custom_call.1} parent=1 // pred_fallthru
      _
    // Predicated region
    $region30: #{tpu_custom_call.1} parent=1 // pred_check
      _
    $region31: #{tpu_custom_call.1} parent=1 // pred_check_branch
      %58 = sbr.rel (0) target = $region33
    $region32: #{tpu_custom_call.1} parent=1 // pred_region
      %59 = dma.done [#allocation6], 1024
    $region33: #{tpu_custom_call.1} parent=1 // pred_fallthru
      _
    %v61 = vld [vmem:[#allocation2] sm:$0xff]
    %v62 = vpack.c.bf16 %v61, %v61
    %v63 = vld [vmem:[#allocation5] sm:$0xf]
    %v64 = vld [vmem:[#allocation5 + $0x4] sm:$0xf]
    %v65 = vld [vmem:[#allocation5 + $0x8] sm:$0xf]
    %v66 = vld [vmem:[#allocation5 + $0xc] sm:$0xf]
    %v67 = vld [vmem:[#allocation5 + $0x10] sm:$0xf]
    %v68 = vld [vmem:[#allocation5 + $0x14] sm:$0xf]
    %v69 = vld [vmem:[#allocation5 + $0x18] sm:$0xf]
    %v70 = vld [vmem:[#allocation5 + $0x1c] sm:$0xf]
    %v71 = vld [vmem:[#allocation5 + $0x20] sm:$0xf]
    %v72 = vld [vmem:[#allocation5 + $0x24] sm:$0xf]
    %v73 = vld [vmem:[#allocation5 + $0x28] sm:$0xf]
    %v74 = vld [vmem:[#allocation5 + $0x2c] sm:$0xf]
    %v75 = vld [vmem:[#allocation5 + $0x30] sm:$0xf]
    %v76 = vld [vmem:[#allocation5 + $0x34] sm:$0xf]
    %v77 = vld [vmem:[#allocation5 + $0x38] sm:$0xf]
    %v78 = vld [vmem:[#allocation5 + $0x3c] sm:$0xf]
    %v79 = vld [vmem:[%s2] sm:$0x1]
    %v81 = vlaneseq
    %v82 = vshrl.u32 %v81, 7
    %v83 = vsub.s32 0, %v82
    %v84 = vrot.slane %v79, %v83
    %v102 = vunpack.c.l.b16 %v63
    %v103 = vunpack.c.l.b16 %v64
    %v104 = vunpack.c.l.b16 %v65
    %v105 = vunpack.c.l.b16 %v66
    %v106 = vunpack.c.l.b16 %v67
    %v107 = vunpack.c.l.b16 %v68
    %v108 = vunpack.c.l.b16 %v69
    %v109 = vunpack.c.l.b16 %v70
    %v110 = vunpack.c.l.b16 %v71
    %v111 = vunpack.c.l.b16 %v72
    %v112 = vunpack.c.l.b16 %v73
    %v113 = vunpack.c.l.b16 %v74
    %v114 = vunpack.c.l.b16 %v75
    %v115 = vunpack.c.l.b16 %v76
    %v116 = vunpack.c.l.b16 %v77
    %v117 = vunpack.c.l.b16 %v78
    %v118 = vpack.c.b16 %v103, %v102
    %v119 = vpack.c.b16 %v105, %v104
    %v120 = vpack.c.b16 %v107, %v106
    %v121 = vpack.c.b16 %v109, %v108
    %v122 = vpack.c.b16 %v111, %v110
    %v123 = vpack.c.b16 %v113, %v112
    %v124 = vpack.c.b16 %v115, %v114
    %v125 = vpack.c.b16 %v117, %v116
    %134 = vmatprep.subr.bf16.mxu0 0
    %135 = vmatpush1.bf16.msra.mxu0 %v125
    %136 = vmatprep.subr.bf16.mxu0 0
    %137 = vmatpush1.bf16.msra.mxu0 %v124
    %138 = vmatprep.subr.bf16.mxu0 0
    %139 = vmatpush1.bf16.msra.mxu0 %v123
    %140 = vmatprep.subr.bf16.mxu0 0
    %141 = vmatpush1.bf16.msra.mxu0 %v122
    %142 = vmatprep.subr.bf16.mxu0 0
    %143 = vmatpush1.bf16.msra.mxu0 %v121
    %144 = vmatprep.subr.bf16.mxu0 0
    %145 = vmatpush1.bf16.msra.mxu0 %v120
    %146 = vmatprep.subr.bf16.mxu0 0
    %147 = vmatpush1.bf16.msra.mxu0 %v119
    %148 = vmatprep.subr.bf16.mxu0 0
    %149 = vmatpush1.bf16.msra.mxu0 %v118
    %150 = vmatprep.subr.bf16.mxu0 0
    %151 = vmatpush2.bf16.msra.mxu0 0
    %152 = vmatprep.subr.bf16.mxu0 0
    %153 = vmatpush2.bf16.msra.mxu0 0
    %154 = vmatprep.subr.bf16.mxu0 0
    %155 = vmatpush2.bf16.msra.mxu0 0
    %156 = vmatprep.subr.bf16.mxu0 0
    %157 = vmatpush2.bf16.msra.mxu0 0
    %158 = vmatprep.subr.bf16.mxu0 0
    %159 = vmatpush2.bf16.msra.mxu0 0
    %160 = vmatprep.subr.bf16.mxu0 0
    %161 = vmatpush2.bf16.msra.mxu0 0
    %162 = vmatprep.subr.bf16.mxu0 0
    %163 = vmatpush2.bf16.msra.mxu0 0
    %164 = vmatprep.subr.bf16.mxu0 0
    %165 = vmatpush2.bf16.msra.mxu0 0
    %166 = vmatprep.mubr.bf16.mxu0 0
    %167 = vmatmul.mubr.bf16.gmra.mxu0 %v62
    %v168 = vpop.f32.mrf.mxu0
    %v169 = vadd.f32 %v84, %v168
    %v170 = vpop.f32.mrf.mxu0
    %v171 = vpop.f32.mrf.mxu0
    %v172 = vpop.f32.mrf.mxu0
    %173 = vdwg.mxu0
    %v174 = vmax.f32 %v169, 0.0
    %v175 = vpack.c.bf16 %v174, %v174
    %v176 = vld [vmem:[#allocation7] sm:$0xf]
    %v177 = vld [vmem:[#allocation7 + $0x4] sm:$0xf]
    %v178 = vld [vmem:[#allocation7 + $0x8] sm:$0xf]
    %v179 = vld [vmem:[#allocation7 + $0xc] sm:$0xf]
    %v180 = vld [vmem:[#allocation7 + $0x10] sm:$0xf]
    %v181 = vld [vmem:[#allocation7 + $0x14] sm:$0xf]
    %v182 = vld [vmem:[#allocation7 + $0x18] sm:$0xf]
    %v183 = vld [vmem:[#allocation7 + $0x1c] sm:$0xf]
    %v184 = vld [vmem:[#allocation7 + $0x20] sm:$0xf]
    %v185 = vld [vmem:[#allocation7 + $0x24] sm:$0xf]
    %v186 = vld [vmem:[#allocation7 + $0x28] sm:$0xf]
    %v187 = vld [vmem:[#allocation7 + $0x2c] sm:$0xf]
    %v188 = vld [vmem:[#allocation7 + $0x30] sm:$0xf]
    %v189 = vld [vmem:[#allocation7 + $0x34] sm:$0xf]
    %v190 = vld [vmem:[#allocation7 + $0x38] sm:$0xf]
    %v191 = vld [vmem:[#allocation7 + $0x3c] sm:$0xf]
    %v192 = vld [vmem:[%s4] sm:$0x1]
    %v194 = vlaneseq
    %v195 = vshrl.u32 %v194, 7
    %v196 = vsub.s32 0, %v195
    %v197 = vrot.slane %v192, %v196
    %v215 = vunpack.c.l.b16 %v176
    %v216 = vunpack.c.l.b16 %v177
    %v217 = vunpack.c.l.b16 %v178
    %v218 = vunpack.c.l.b16 %v179
    %v219 = vunpack.c.l.b16 %v180
    %v220 = vunpack.c.l.b16 %v181
    %v221 = vunpack.c.l.b16 %v182
    %v222 = vunpack.c.l.b16 %v183
    %v223 = vunpack.c.l.b16 %v184
    %v224 = vunpack.c.l.b16 %v185
    %v225 = vunpack.c.l.b16 %v186
    %v226 = vunpack.c.l.b16 %v187
    %v227 = vunpack.c.l.b16 %v188
    %v228 = vunpack.c.l.b16 %v189
    %v229 = vunpack.c.l.b16 %v190
    %v230 = vunpack.c.l.b16 %v191
    %v231 = vpack.c.b16 %v216, %v215
    %v232 = vpack.c.b16 %v218, %v217
    %v233 = vpack.c.b16 %v220, %v219
    %v234 = vpack.c.b16 %v222, %v221
    %v235 = vpack.c.b16 %v224, %v223
    %v236 = vpack.c.b16 %v226, %v225
    %v237 = vpack.c.b16 %v228, %v227
    %v238 = vpack.c.b16 %v230, %v229
    %247 = vmatprep.subr.bf16.mxu0 0
    %248 = vmatpush1.bf16.msra.mxu0 %v238
    %249 = vmatprep.subr.bf16.mxu0 0
    %250 = vmatpush1.bf16.msra.mxu0 %v237
    %251 = vmatprep.subr.bf16.mxu0 0
    %252 = vmatpush1.bf16.msra.mxu0 %v236
    %253 = vmatprep.subr.bf16.mxu0 0
    %254 = vmatpush1.bf16.msra.mxu0 %v235
    %255 = vmatprep.subr.bf16.mxu0 0
    %256 = vmatpush1.bf16.msra.mxu0 %v234
    %257 = vmatprep.subr.bf16.mxu0 0
    %258 = vmatpush1.bf16.msra.mxu0 %v233
    %259 = vmatprep.subr.bf16.mxu0 0
    %260 = vmatpush1.bf16.msra.mxu0 %v232
    %261 = vmatprep.subr.bf16.mxu0 0
    %262 = vmatpush1.bf16.msra.mxu0 %v231
    %263 = vmatprep.subr.bf16.mxu0 0
    %264 = vmatpush2.bf16.msra.mxu0 0
    %265 = vmatprep.subr.bf16.mxu0 0
    %266 = vmatpush2.bf16.msra.mxu0 0
    %267 = vmatprep.subr.bf16.mxu0 0
    %268 = vmatpush2.bf16.msra.mxu0 0
    %269 = vmatprep.subr.bf16.mxu0 0
    %270 = vmatpush2.bf16.msra.mxu0 0
    %271 = vmatprep.subr.bf16.mxu0 0
    %272 = vmatpush2.bf16.msra.mxu0 0
    %273 = vmatprep.subr.bf16.mxu0 0
    %274 = vmatpush2.bf16.msra.mxu0 0
    %275 = vmatprep.subr.bf16.mxu0 0
    %276 = vmatpush2.bf16.msra.mxu0 0
    %277 = vmatprep.subr.bf16.mxu0 0
    %278 = vmatpush2.bf16.msra.mxu0 0
    %279 = vmatprep.mubr.bf16.mxu0 0
    %280 = vmatmul.mubr.bf16.gmra.mxu0 %v175
    %v281 = vpop.f32.mrf.mxu0
    %v282 = vadd.f32 %v197, %v281
    %v283 = vpop.f32.mrf.mxu0
    %v284 = vpop.f32.mrf.mxu0
    %v285 = vpop.f32.mrf.mxu0
    %286 = vdwg.mxu0
    %v287 = vlaneseq
    %v288 = vand.u32 %v287, 127
    %vm289 = vcmp.lt.s32.totalorder %v288, 4
    %v290 = vsel %vm289, %v282, -1e+30
    %291 = vmax.xlane.f32.xlu0 %v290
    %v292 = vpop.xlane.xlu0 %291
    %v293 = vsub.f32 %v290, %v292
    %v294 = vmul.f32 %v293, 1.442695
    %v295 = vpow.pop %v294
    %296 = vadd.xlane.f32.xlu0 %v295
    %v297 = vpop.xlane.xlu0 %296
    %v298 = vrcp.pop %v297
    %v299 = vmul.f32 %v295, %v298
    %300 = vst [vmem:[#allocation8] sm:$0xff] %v299
    // Predicated region
    $region34: #{tpu_custom_call.1} parent=1 // pred_check
      _
    $region35: #{tpu_custom_call.1} parent=1 // pred_check_branch
      %302 = sbr.rel (0) target = $region37
    $region36: #{tpu_custom_call.1} parent=1 // pred_region
      %s304 = ssub.s32 128, 128
      %305 = vsyncadd [#allocation4], %s304
      %s307 = sshll.u32 [#allocation8], 4
      %s308 = int_to_ptr.vmem [resolvable:$true] %s307
      %310 = dma.vmem_to_hbm [thread:$0]  %s308, 128, %s5, [#allocation4]
    $region37: #{tpu_custom_call.1} parent=1 // pred_fallthru
      _
    // Predicated region
    $region38: #{tpu_custom_call.1} parent=1 // pred_check
      _
    $region39: #{tpu_custom_call.1} parent=1 // pred_check_branch
      %312 = sbr.rel (0) target = $region41
    $region40: #{tpu_custom_call.1} parent=1 // pred_region
      %313 = dma.done [#allocation4], 128
    $region41: #{tpu_custom_call.1} parent=1 // pred_fallthru
      _
    %314 = vsyncpa [#allocation3], 1
    %315 = vsyncpa [#allocation6], 1
    %316 = vsyncpa [#allocation4], 1

</llo_original>
